<compile_context>
chip_gen: v7x
topology: tpu7x:2x2x1
jax: 0.10.0
libtpu: 0.0.40
codegen_flags: <defaults>
</compile_context>

<pallas_src>
import functools

import jax
import jax.numpy as jnp
from jax.experimental import pallas as pl
from jax.experimental.pallas import tpu as pltpu


def _round_up(x, m):
    return ((x + m - 1) // m) * m


def _build_support_set(supports, cheb_k):
    """Chebyshev polynomial expansion (tiny N x N glue, plain JAX, timestep-invariant)."""
    N = supports[0].shape[0]
    support_set = []
    for S in supports:
        ks = [jnp.eye(N, dtype=S.dtype), S]
        for _ in range(2, cheb_k):
            ks.append(2.0 * S @ ks[-1] - ks[-2])
        support_set.extend(ks)
    return support_set


def _sigmoid_via_tanh(x):
    # sigmoid(x) == 0.5 * (1 + tanh(x/2)): one EUP op instead of exp + reciprocal.
    return 0.5 * (jnp.tanh(0.5 * x) + 1.0)


def _agcrn_cell_kernel(xin_ref, sT_ref, wrT_ref, c_ref,
                       h_out_ref, c_out_ref, gr_ref,
                       *, batch, nodes, cpad, k2, hidden):
    """Fused AGCRN cell: graph conv + gate projection + c/h update (grid=1).

    xin_ref : (B*C_pad, N)       per-batch feature-major [x|h]^T, batches on rows
    sT_ref  : (N, K2*N)          [S_0^T | S_1^T | ... ] (Chebyshev supports)
    wrT_ref : (4H, K2*C_pad + 1) transposed gate weights, last column = bias
    c_ref   : (H, B*N)           previous cell state, feature-major
    h_out   : (H, B*N)
    c_out   : (H, B*N)           (donated c_ref HBM buffer)
    gr_ref  : (K2*C_pad + 1, B*N) VMEM scratch holding the pivoted G (+ ones row)
    """
    B, N, C, K2, H = batch, nodes, cpad, k2, hidden

    # ---- Stage 1: one MXU pass fusing batch, all supports, and x|h. ----------
    # g_all[(b, c), (k, n)] = sum_m xin[b, m, c] * S_k[n, m]
    g_all = jnp.dot(xin_ref[...], sT_ref[...], preferred_element_type=jnp.float32)

    # ---- VMEM pivot: (b,c) x (k,n) -> (k,c) x (b,n), static block copies -----
    # (no in-kernel transposes, no HBM round-trip; offsets are 8-sublane aligned
    #  because C was padded to C_pad).
    for k in range(K2):
        for b in range(B):
            gr_ref[k * C:(k + 1) * C, b * N:(b + 1) * N] = (
                g_all[b * C:(b + 1) * C, k * N:(k + 1) * N].astype(gr_ref.dtype))
    # Ones row: folds the gate bias into the stage-2 matmul (bias = last wrT col).
    gr_ref[K2 * C:K2 * C + 1, :] = jnp.ones((1, B * N), dtype=gr_ref.dtype)

    # ---- Stage 2: one batch-fused gate projection, K = K2*C_pad + 1 ----------
    z = jnp.dot(wrT_ref[...], gr_ref[...],
                preferred_element_type=jnp.float32)          # (4H, B*N)

    # ---- Gates: sublane slices, full lane width over the B*N columns ---------
    i_g = _sigmoid_via_tanh(z[0 * H:1 * H, :])
    f_g = _sigmoid_via_tanh(z[1 * H:2 * H, :])
    o_g = _sigmoid_via_tanh(z[2 * H:3 * H, :])
    g_g = jnp.tanh(z[3 * H:4 * H, :])

    c_new = f_g * c_ref[...] + i_g * g_g
    h_out_ref[...] = (o_g * jnp.tanh(c_new)).astype(h_out_ref.dtype)
    c_out_ref[...] = c_new.astype(c_out_ref.dtype)


def agcrn_cell_forward(x, state, supports, gate_w, gate_b, cheb_k,
                       matmul_dtype=None):
    """Pallas implementation of AGCRNCell.forward.

    x        : (B, N, dim_in)
    state    : (h, c), each (B, N, hidden_dim)
    supports : list of two (N, N) matrices
    gate_w   : (2*cheb_k*(dim_in+hidden_dim), 4*hidden_dim)
    gate_b   : (4*hidden_dim,)
    returns  : ((h_new, c_new), support_last)
    """
    h, c = state
    B, N, din = x.shape
    H = h.shape[-1]
    C = din + H
    K2 = 2 * cheb_k
    C_pad = _round_up(C, 8)            # 8-sublane align the per-support feature block
    BN = B * N
    dtype = x.dtype
    mm_dtype = dtype if matmul_dtype is None else matmul_dtype

    # ---- Timestep-invariant prep (hoist outside the scan in the full RNN). ---
    support_set = _build_support_set(supports, cheb_k)
    support_last = support_set[-1]
    sT = jnp.concatenate([S.T for S in support_set], axis=1)        # (N, K2*N)

    w3 = gate_w.reshape(K2, C, 4 * H)
    w3 = jnp.pad(w3, ((0, 0), (0, C_pad - C), (0, 0)))              # zero-pad features
    wrT = jnp.concatenate(
        [w3.reshape(K2 * C_pad, 4 * H).T, gate_b.reshape(4 * H, 1)], axis=1)
    # wrT: (4H, K2*C_pad + 1); last column is the bias, folded into the MXU pass.

    # ---- Per-step input plumbing (cheap layout-only XLA ops). -----------------
    xin = jnp.concatenate([x, h], axis=-1)                          # (B, N, C)
    xin = jnp.pad(xin, ((0, 0), (0, 0), (0, C_pad - C)))
    xin_ct = jnp.transpose(xin, (0, 2, 1)).reshape(B * C_pad, N)    # rows (b,c), cols m
    c_t = jnp.transpose(c, (2, 0, 1)).reshape(H, BN)                # (H, B*N)
    # TODO(synk): in the full RNN, keep (h, c) in this (H, B*N) layout across
    # timesteps and only transpose at sequence boundaries; then the aliased
    # c output below becomes a true in-place state update (here it only
    # donates the transposed copy's buffer).

    sT = sT.astype(mm_dtype)
    xin_ct = xin_ct.astype(mm_dtype)
    wrT = wrT.astype(mm_dtype)

    kernel = functools.partial(_agcrn_cell_kernel, batch=B, nodes=N,
                               cpad=C_pad, k2=K2, hidden=H)

    flops = (2 * (B * C_pad) * N * (K2 * N)
             + 2 * (4 * H) * (K2 * C_pad + 1) * BN)
    bytes_accessed = 4 * (B * C_pad * N + N * K2 * N
                          + 4 * H * (K2 * C_pad + 1) + 3 * H * BN)

    # Everything fits comfortably in VMEM at these shapes -> single program,
    # whole operands as blocks (no per-step grid overhead, full-M matmuls).
    # TODO(synk): for large graphs / batches (B*N, K2*N no longer VMEM-resident),
    # add a "parallel" grid axis over B*N column tiles (also feeds both v7x
    # TensorCores) and an "arbitrary" contraction axis over node blocks with a
    # VMEM accumulator; block sizes must be re-derived against v7x's 64 MiB VMEM.
    h_t, c_t_new = pl.pallas_call(
        kernel,
        out_shape=(jax.ShapeDtypeStruct((H, BN), dtype),
                   jax.ShapeDtypeStruct((H, BN), dtype)),
        grid=(1,),
        in_specs=[
            pl.BlockSpec((B * C_pad, N), lambda i: (0, 0)),
            pl.BlockSpec((N, K2 * N), lambda i: (0, 0)),
            pl.BlockSpec((4 * H, K2 * C_pad + 1), lambda i: (0, 0)),
            pl.BlockSpec((H, BN), lambda i: (0, 0)),
        ],
        out_specs=(pl.BlockSpec((H, BN), lambda i: (0, 0)),
                   pl.BlockSpec((H, BN), lambda i: (0, 0))),
        scratch_shapes=[pltpu.VMEM((K2 * C_pad + 1, BN), mm_dtype)],
        input_output_aliases={3: 1},          # donate the c_t buffer to new-c
        compiler_params=pltpu.CompilerParams(
            dimension_semantics=("arbitrary",),
            vmem_limit_bytes=32 * 1024 * 1024),   # explicit, safe on v5e/v6e/v7x
        cost_estimate=pl.CostEstimate(flops=flops,
                                      transcendentals=5 * H * BN,
                                      bytes_accessed=bytes_accessed),
    )(xin_ct, sT, wrT, c_t)

    # Back to the module's (B, N, H) layout (sequence-boundary plumbing).
    h_new = h_t.reshape(H, B, N).transpose(1, 2, 0)
    c_new = c_t_new.reshape(H, B, N).transpose(1, 2, 0)
    return (h_new, c_new), support_last


def _reference_forward(x, state, supports, gate_w, gate_b, cheb_k):
    """Pure-JAX reference matching the PyTorch semantics."""
    h, c = state
    xin = jnp.concatenate([x, h], axis=-1)
    support_set = _build_support_set(supports, cheb_k)
    x_g = jnp.concatenate(
        [jnp.einsum('nm,bmc->bnc', S, xin) for S in support_set], axis=-1)
    z = jnp.einsum('bni,io->bno', x_g, gate_w) + gate_b
    H = h.shape[-1]
    i = jax.nn.sigmoid(z[..., 0 * H:1 * H])
    f = jax.nn.sigmoid(z[..., 1 * H:2 * H])
    o = jax.nn.sigmoid(z[..., 2 * H:3 * H])
    g = jnp.tanh(z[..., 3 * H:4 * H])
    c_new = f * c + i * g
    h_new = o * jnp.tanh(c_new)
    return (h_new, c_new), support_set[-1]


if __name__ == "__main__":
    # Small, deterministic config.
    B, N = 2, 16            # batch, nodes
    dim_in, hidden = 4, 8   # input features, hidden_dim (dim_out)
    cheb_k = 3
    C = dim_in + hidden     # AGCN input feature dim
    K2 = 2 * cheb_k

    key = jax.random.PRNGKey(0)
    kx, kh, kc, ks1, ks2, kw = jax.random.split(key, 6)

    x = jax.random.normal(kx, (B, N, dim_in), dtype=jnp.float32)
    h0 = jax.random.normal(kh, (B, N, hidden), dtype=jnp.float32)
    c0 = jax.random.normal(kc, (B, N, hidden), dtype=jnp.float32)

    # Two support (adjacency) matrices; row-softmax keeps Chebyshev terms tame.
    s1 = jax.nn.softmax(jax.random.normal(ks1, (N, N), dtype=jnp.float32), axis=-1)
    s2 = jax.nn.softmax(jax.random.normal(ks2, (N, N), dtype=jnp.float32), axis=-1)
    supports = [s1, s2]

    # Gate AGCN parameters (xavier_normal_ weights, zero bias), deterministic.
    fan_in, fan_out = K2 * C, 4 * hidden
    std = (2.0 / (fan_in + fan_out)) ** 0.5
    gate_w = std * jax.random.normal(kw, (fan_in, fan_out), dtype=jnp.float32)
    gate_b = jnp.zeros((fan_out,), dtype=jnp.float32)

    fwd = jax.jit(functools.partial(agcrn_cell_forward, cheb_k=cheb_k))
    (h_new, c_new), support_last = fwd(x, (h0, c0), supports, gate_w, gate_b)
    jax.block_until_ready((h_new, c_new, support_last))

    # Correctness check against pure-JAX reference.
    (h_ref, c_ref), sl_ref = _reference_forward(
        x, (h0, c0), supports, gate_w, gate_b, cheb_k)
    assert jnp.allclose(h_new, h_ref, atol=1e-4, rtol=1e-4)
    assert jnp.allclose(c_new, c_ref, atol=1e-4, rtol=1e-4)
    assert jnp.allclose(support_last, sl_ref, atol=1e-5, rtol=1e-5)

    print("KERNEL_OK")
</pallas_src>

<mosaic_0001>
module attributes {stable_mosaic.version = 11 : i64} {
  func.func @_agcrn_cell_kernel(%arg0: i32, %arg1: memref<32x16xf32, #tpu.memory_space<vmem>>, %arg2: memref<16x96xf32, #tpu.memory_space<vmem>>, %arg3: memref<32x97xf32, #tpu.memory_space<vmem>>, %arg4: memref<8x32xf32, #tpu.memory_space<vmem>>, %arg5: memref<8x32xf32, #tpu.memory_space<vmem>>, %arg6: memref<8x32xf32, #tpu.memory_space<vmem>>, %arg7: memref<97x32xf32, #tpu.memory_space<vmem>>) attributes {dimension_semantics = [#tpu.dimension_semantics<arbitrary>], iteration_bounds = array<i64: 1>, scalar_prefetch = 0 : i64, scratch_operands = 1 : i64, tpu.core_type = #tpu.core_type<tc>, window_params = [{pipeline_mode = #tpu.pipeline_mode<synchronous>, transform_indices = @transform_0, window_bounds = array<i64: 32, 16>}, {pipeline_mode = #tpu.pipeline_mode<synchronous>, transform_indices = @transform_1, window_bounds = array<i64: 16, 96>}, {pipeline_mode = #tpu.pipeline_mode<synchronous>, transform_indices = @transform_2, window_bounds = array<i64: 32, 97>}, {pipeline_mode = #tpu.pipeline_mode<synchronous>, transform_indices = @transform_3, window_bounds = array<i64: 8, 32>}, {pipeline_mode = #tpu.pipeline_mode<synchronous>, transform_indices = @transform_4, window_bounds = array<i64: 8, 32>}, {pipeline_mode = #tpu.pipeline_mode<synchronous>, transform_indices = @transform_5, window_bounds = array<i64: 8, 32>}]} {
    %c0 = arith.constant 0 : index
    %c0_0 = arith.constant 0 : index
    %0 = vector.load %arg1[%c0, %c0_0] : memref<32x16xf32, #tpu.memory_space<vmem>>, vector<32x16xf32>
    %c0_1 = arith.constant 0 : index
    %c0_2 = arith.constant 0 : index
    %1 = vector.load %arg2[%c0_1, %c0_2] : memref<16x96xf32, #tpu.memory_space<vmem>>, vector<16x96xf32>
    %cst = arith.constant dense<0.000000e+00> : vector<32x96xf32>
    %2 = tpu.matmul %0, %1, %cst {dimension_numbers = #tpu.dot_dimension_numbers<[1], [0], [0], [1], [0, 0, 1, 1], [], []>} : vector<32x16xf32>, vector<16x96xf32>, vector<32x96xf32> -> vector<32x96xf32>
    %3 = vector.extract_strided_slice %2 {offsets = [0, 0], sizes = [16, 16], strides = [1, 1]} : vector<32x96xf32> to vector<16x16xf32>
    %c0_3 = arith.constant 0 : index
    %c0_4 = arith.constant 0 : index
    %4 = vector.load %arg7[%c0_3, %c0_4] : memref<97x32xf32, #tpu.memory_space<vmem>>, vector<16x16xf32>
    tpu.vector_store %arg7[%c0_3, %c0_4], %3 {strides = array<i32>} : memref<97x32xf32, #tpu.memory_space<vmem>>, vector<16x16xf32>,
    %5 = vector.extract_strided_slice %2 {offsets = [16, 0], sizes = [16, 16], strides = [1, 1]} : vector<32x96xf32> to vector<16x16xf32>
    %c0_5 = arith.constant 0 : index
    %c16 = arith.constant 16 : index
    %6 = vector.load %arg7[%c0_5, %c16] : memref<97x32xf32, #tpu.memory_space<vmem>>, vector<16x16xf32>
    tpu.vector_store %arg7[%c0_5, %c16], %5 {strides = array<i32>} : memref<97x32xf32, #tpu.memory_space<vmem>>, vector<16x16xf32>,
    %7 = vector.extract_strided_slice %2 {offsets = [0, 16], sizes = [16, 16], strides = [1, 1]} : vector<32x96xf32> to vector<16x16xf32>
    %c16_6 = arith.constant 16 : index
    %c0_7 = arith.constant 0 : index
    %8 = vector.load %arg7[%c16_6, %c0_7] : memref<97x32xf32, #tpu.memory_space<vmem>>, vector<16x16xf32>
    tpu.vector_store %arg7[%c16_6, %c0_7], %7 {strides = array<i32>} : memref<97x32xf32, #tpu.memory_space<vmem>>, vector<16x16xf32>,
    %9 = vector.extract_strided_slice %2 {offsets = [16, 16], sizes = [16, 16], strides = [1, 1]} : vector<32x96xf32> to vector<16x16xf32>
    %c16_8 = arith.constant 16 : index
    %c16_9 = arith.constant 16 : index
    %10 = vector.load %arg7[%c16_8, %c16_9] : memref<97x32xf32, #tpu.memory_space<vmem>>, vector<16x16xf32>
    tpu.vector_store %arg7[%c16_8, %c16_9], %9 {strides = array<i32>} : memref<97x32xf32, #tpu.memory_space<vmem>>, vector<16x16xf32>,
    %11 = vector.extract_strided_slice %2 {offsets = [0, 32], sizes = [16, 16], strides = [1, 1]} : vector<32x96xf32> to vector<16x16xf32>
    %c32 = arith.constant 32 : index
    %c0_10 = arith.constant 0 : index
    %12 = vector.load %arg7[%c32, %c0_10] : memref<97x32xf32, #tpu.memory_space<vmem>>, vector<16x16xf32>
    tpu.vector_store %arg7[%c32, %c0_10], %11 {strides = array<i32>} : memref<97x32xf32, #tpu.memory_space<vmem>>, vector<16x16xf32>,
    %13 = vector.extract_strided_slice %2 {offsets = [16, 32], sizes = [16, 16], strides = [1, 1]} : vector<32x96xf32> to vector<16x16xf32>
    %c32_11 = arith.constant 32 : index
    %c16_12 = arith.constant 16 : index
    %14 = vector.load %arg7[%c32_11, %c16_12] : memref<97x32xf32, #tpu.memory_space<vmem>>, vector<16x16xf32>
    tpu.vector_store %arg7[%c32_11, %c16_12], %13 {strides = array<i32>} : memref<97x32xf32, #tpu.memory_space<vmem>>, vector<16x16xf32>,
    %15 = vector.extract_strided_slice %2 {offsets = [0, 48], sizes = [16, 16], strides = [1, 1]} : vector<32x96xf32> to vector<16x16xf32>
    %c48 = arith.constant 48 : index
    %c0_13 = arith.constant 0 : index
    %16 = vector.load %arg7[%c48, %c0_13] : memref<97x32xf32, #tpu.memory_space<vmem>>, vector<16x16xf32>
    tpu.vector_store %arg7[%c48, %c0_13], %15 {strides = array<i32>} : memref<97x32xf32, #tpu.memory_space<vmem>>, vector<16x16xf32>,
    %17 = vector.extract_strided_slice %2 {offsets = [16, 48], sizes = [16, 16], strides = [1, 1]} : vector<32x96xf32> to vector<16x16xf32>
    %c48_14 = arith.constant 48 : index
    %c16_15 = arith.constant 16 : index
    %18 = vector.load %arg7[%c48_14, %c16_15] : memref<97x32xf32, #tpu.memory_space<vmem>>, vector<16x16xf32>
    tpu.vector_store %arg7[%c48_14, %c16_15], %17 {strides = array<i32>} : memref<97x32xf32, #tpu.memory_space<vmem>>, vector<16x16xf32>,
    %19 = vector.extract_strided_slice %2 {offsets = [0, 64], sizes = [16, 16], strides = [1, 1]} : vector<32x96xf32> to vector<16x16xf32>
    %c64 = arith.constant 64 : index
    %c0_16 = arith.constant 0 : index
    %20 = vector.load %arg7[%c64, %c0_16] : memref<97x32xf32, #tpu.memory_space<vmem>>, vector<16x16xf32>
    tpu.vector_store %arg7[%c64, %c0_16], %19 {strides = array<i32>} : memref<97x32xf32, #tpu.memory_space<vmem>>, vector<16x16xf32>,
    %21 = vector.extract_strided_slice %2 {offsets = [16, 64], sizes = [16, 16], strides = [1, 1]} : vector<32x96xf32> to vector<16x16xf32>
    %c64_17 = arith.constant 64 : index
    %c16_18 = arith.constant 16 : index
    %22 = vector.load %arg7[%c64_17, %c16_18] : memref<97x32xf32, #tpu.memory_space<vmem>>, vector<16x16xf32>
    tpu.vector_store %arg7[%c64_17, %c16_18], %21 {strides = array<i32>} : memref<97x32xf32, #tpu.memory_space<vmem>>, vector<16x16xf32>,
    %23 = vector.extract_strided_slice %2 {offsets = [0, 80], sizes = [16, 16], strides = [1, 1]} : vector<32x96xf32> to vector<16x16xf32>
    %c80 = arith.constant 80 : index
    %c0_19 = arith.constant 0 : index
    %24 = vector.load %arg7[%c80, %c0_19] : memref<97x32xf32, #tpu.memory_space<vmem>>, vector<16x16xf32>
    tpu.vector_store %arg7[%c80, %c0_19], %23 {strides = array<i32>} : memref<97x32xf32, #tpu.memory_space<vmem>>, vector<16x16xf32>,
    %25 = vector.extract_strided_slice %2 {offsets = [16, 80], sizes = [16, 16], strides = [1, 1]} : vector<32x96xf32> to vector<16x16xf32>
    %c80_20 = arith.constant 80 : index
    %c16_21 = arith.constant 16 : index
    %26 = vector.load %arg7[%c80_20, %c16_21] : memref<97x32xf32, #tpu.memory_space<vmem>>, vector<16x16xf32>
    tpu.vector_store %arg7[%c80_20, %c16_21], %25 {strides = array<i32>} : memref<97x32xf32, #tpu.memory_space<vmem>>, vector<16x16xf32>,
    %cst_22 = arith.constant 1.000000e+00 : f32
    %27 = vector.broadcast %cst_22 : f32 to vector<1x32xf32>
    %c96 = arith.constant 96 : index
    %c0_23 = arith.constant 0 : index
    %28 = vector.load %arg7[%c96, %c0_23] : memref<97x32xf32, #tpu.memory_space<vmem>>, vector<1x32xf32>
    tpu.vector_store %arg7[%c96, %c0_23], %27 {strides = array<i32>} : memref<97x32xf32, #tpu.memory_space<vmem>>, vector<1x32xf32>,
    %c0_24 = arith.constant 0 : index
    %c0_25 = arith.constant 0 : index
    %29 = vector.load %arg3[%c0_24, %c0_25] : memref<32x97xf32, #tpu.memory_space<vmem>>, vector<32x97xf32>
    %c0_26 = arith.constant 0 : index
    %c0_27 = arith.constant 0 : index
    %30 = vector.load %arg7[%c0_26, %c0_27] : memref<97x32xf32, #tpu.memory_space<vmem>>, vector<97x32xf32>
    %cst_28 = arith.constant dense<0.000000e+00> : vector<32x32xf32>
    %31 = tpu.matmul %29, %30, %cst_28 {dimension_numbers = #tpu.dot_dimension_numbers<[1], [0], [0], [1], [0, 0, 1, 1], [], []>} : vector<32x97xf32>, vector<97x32xf32>, vector<32x32xf32> -> vector<32x32xf32>
    %32 = vector.extract_strided_slice %31 {offsets = [0, 0], sizes = [8, 32], strides = [1, 1]} : vector<32x32xf32> to vector<8x32xf32>
    %cst_29 = arith.constant 5.000000e-01 : f32
    %33 = vector.broadcast %cst_29 : f32 to vector<8x32xf32>
    %34 = arith.mulf %33, %32 : vector<8x32xf32>
    %35 = math.tanh %34 : vector<8x32xf32>
    %cst_30 = arith.constant 1.000000e+00 : f32
    %36 = vector.broadcast %cst_30 : f32 to vector<8x32xf32>
    %37 = arith.addf %35, %36 : vector<8x32xf32>
    %cst_31 = arith.constant 5.000000e-01 : f32
    %38 = vector.broadcast %cst_31 : f32 to vector<8x32xf32>
    %39 = arith.mulf %38, %37 : vector<8x32xf32>
    %40 = vector.extract_strided_slice %31 {offsets = [8, 0], sizes = [8, 32], strides = [1, 1]} : vector<32x32xf32> to vector<8x32xf32>
    %cst_32 = arith.constant 5.000000e-01 : f32
    %41 = vector.broadcast %cst_32 : f32 to vector<8x32xf32>
    %42 = arith.mulf %41, %40 : vector<8x32xf32>
    %43 = math.tanh %42 : vector<8x32xf32>
    %cst_33 = arith.constant 1.000000e+00 : f32
    %44 = vector.broadcast %cst_33 : f32 to vector<8x32xf32>
    %45 = arith.addf %43, %44 : vector<8x32xf32>
    %cst_34 = arith.constant 5.000000e-01 : f32
    %46 = vector.broadcast %cst_34 : f32 to vector<8x32xf32>
    %47 = arith.mulf %46, %45 : vector<8x32xf32>
    %48 = vector.extract_strided_slice %31 {offsets = [16, 0], sizes = [8, 32], strides = [1, 1]} : vector<32x32xf32> to vector<8x32xf32>
    %cst_35 = arith.constant 5.000000e-01 : f32
    %49 = vector.broadcast %cst_35 : f32 to vector<8x32xf32>
    %50 = arith.mulf %49, %48 : vector<8x32xf32>
    %51 = math.tanh %50 : vector<8x32xf32>
    %cst_36 = arith.constant 1.000000e+00 : f32
    %52 = vector.broadcast %cst_36 : f32 to vector<8x32xf32>
    %53 = arith.addf %51, %52 : vector<8x32xf32>
    %cst_37 = arith.constant 5.000000e-01 : f32
    %54 = vector.broadcast %cst_37 : f32 to vector<8x32xf32>
    %55 = arith.mulf %54, %53 : vector<8x32xf32>
    %56 = vector.extract_strided_slice %31 {offsets = [24, 0], sizes = [8, 32], strides = [1, 1]} : vector<32x32xf32> to vector<8x32xf32>
    %57 = math.tanh %56 : vector<8x32xf32>
    %c0_38 = arith.constant 0 : index
    %c0_39 = arith.constant 0 : index
    %58 = vector.load %arg4[%c0_38, %c0_39] : memref<8x32xf32, #tpu.memory_space<vmem>>, vector<8x32xf32>
    %59 = arith.mulf %47, %58 : vector<8x32xf32>
    %60 = arith.mulf %39, %57 : vector<8x32xf32>
    %61 = arith.addf %59, %60 : vector<8x32xf32>
    %62 = math.tanh %61 : vector<8x32xf32>
    %63 = arith.mulf %55, %62 : vector<8x32xf32>
    %c0_40 = arith.constant 0 : index
    %c0_41 = arith.constant 0 : index
    %64 = vector.load %arg5[%c0_40, %c0_41] : memref<8x32xf32, #tpu.memory_space<vmem>>, vector<8x32xf32>
    tpu.vector_store %arg5[%c0_40, %c0_41], %63 {strides = array<i32>} : memref<8x32xf32, #tpu.memory_space<vmem>>, vector<8x32xf32>,
    %c0_42 = arith.constant 0 : index
    %c0_43 = arith.constant 0 : index
    %65 = vector.load %arg6[%c0_42, %c0_43] : memref<8x32xf32, #tpu.memory_space<vmem>>, vector<8x32xf32>
    tpu.vector_store %arg6[%c0_42, %c0_43], %61 {strides = array<i32>} : memref<8x32xf32, #tpu.memory_space<vmem>>, vector<8x32xf32>,
    return
  }
  func.func @transform_0(%arg0: i32) -> (i32, i32) {
    %c0_i32 = arith.constant 0 : i32
    %c0_i32_0 = arith.constant 0 : i32
    %c0_i32_1 = arith.constant 0 : i32
    return %c0_i32, %c0_i32_0 : i32, i32
  }
  func.func @transform_1(%arg0: i32) -> (i32, i32) {
    %c0_i32 = arith.constant 0 : i32
    %c0_i32_0 = arith.constant 0 : i32
    %c0_i32_1 = arith.constant 0 : i32
    return %c0_i32, %c0_i32_0 : i32, i32
  }
  func.func @transform_2(%arg0: i32) -> (i32, i32) {
    %c0_i32 = arith.constant 0 : i32
    %c0_i32_0 = arith.constant 0 : i32
    %c0_i32_1 = arith.constant 0 : i32
    return %c0_i32, %c0_i32_0 : i32, i32
  }
  func.func @transform_3(%arg0: i32) -> (i32, i32) {
    %c0_i32 = arith.constant 0 : i32
    %c0_i32_0 = arith.constant 0 : i32
    %c0_i32_1 = arith.constant 0 : i32
    return %c0_i32, %c0_i32_0 : i32, i32
  }
  func.func @transform_4(%arg0: i32) -> (i32, i32) {
    %c0_i32 = arith.constant 0 : i32
    %c0_i32_0 = arith.constant 0 : i32
    %c0_i32_1 = arith.constant 0 : i32
    return %c0_i32, %c0_i32_0 : i32, i32
  }
  func.func @transform_5(%arg0: i32) -> (i32, i32) {
    %c0_i32 = arith.constant 0 : i32
    %c0_i32_0 = arith.constant 0 : i32
    %c0_i32_1 = arith.constant 0 : i32
    return %c0_i32, %c0_i32_0 : i32, i32
  }
}

</mosaic_0001>

<llo_original>
// kernel: agcrn_cell_forward.1
$region0: #{agcrn_cell_forward.1}
  #allocation0 [shape = 'u32[]', space=smem, size = 0x4, offset = 0x4, fixed_abs, tag = 'smem constant byte address 0x4 - core index']
  #allocation1 [shape = 'u32[144,128]{1,0:T(1,128)}', space=vmem, size = 0x12000, scoped, tag = 'internal scratch']
  #allocation2 [shape = 'f32[97,32]{1,0:T(8,128)}', space=vmem, size = 0xd000, scoped, tag = 'scratch operand']
  %s0 = inlined_call_operand.vmem [shape: f32[32,16], index: 0, kind: input, shape index: {}]
  %s1 = inlined_call_operand.vmem [shape: f32[16,96], index: 1, kind: input, shape index: {}]
  %s2 = inlined_call_operand.vmem [shape: f32[32,97], index: 2, kind: input, shape index: {}]
  %s3 = inlined_call_operand.vmem [shape: f32[8,32], index: 3, kind: input, shape index: {}, may-alias: {3,5}]
  %s4 = inlined_call_operand.vmem [shape: f32[8,32], index: 4, kind: output, shape index: {0}]
  %s5 = inlined_call_operand.vmem [shape: f32[8,32], index: 5, kind: output, shape index: {1}, may-alias: {3,5}]
  %6 = xla_tuple %s4, %s5
  %s7 = sld [smem:[#allocation0]]
  $region34: #{agcrn_cell_forward.1} parent=0
    _
  %s9 = ssub.s32 1, %s7
  %s10 = scalar_select 0, %s9, %s7
  // Predicated region
  $region2: #{agcrn_cell_forward.1} parent=0 // pred_check
    _
  $region3: #{agcrn_cell_forward.1} parent=0 // pred_check_branch
    %12 = sbr.rel (0) target = $region5
  $region4: #{agcrn_cell_forward.1} parent=0 // pred_region
    _
  $region5: #{agcrn_cell_forward.1} parent=0 // pred_fallthru
    _
  // Predicated region
  $region6: #{agcrn_cell_forward.1} parent=0 // pred_check
    _
  $region7: #{agcrn_cell_forward.1} parent=0 // pred_check_branch
    %14 = sbr.rel (0) target = $region9
  $region8: #{agcrn_cell_forward.1} parent=0 // pred_region
    _
  $region9: #{agcrn_cell_forward.1} parent=0 // pred_fallthru
    _
  // Predicated region
  $region10: #{agcrn_cell_forward.1} parent=0 // pred_check
    _
  $region11: #{agcrn_cell_forward.1} parent=0 // pred_check_branch
    %16 = sbr.rel (0) target = $region13
  $region12: #{agcrn_cell_forward.1} parent=0 // pred_region
    _
  $region13: #{agcrn_cell_forward.1} parent=0 // pred_fallthru
    _
  // Predicated region
  $region14: #{agcrn_cell_forward.1} parent=0 // pred_check
    _
  $region15: #{agcrn_cell_forward.1} parent=0 // pred_check_branch
    %18 = sbr.rel (0) target = $region17
  $region16: #{agcrn_cell_forward.1} parent=0 // pred_region
    _
  $region17: #{agcrn_cell_forward.1} parent=0 // pred_fallthru
    _
  %v19 = vld [vmem:[%s0] sm:$0xff]
  %v20 = vld [vmem:[%s0 + $0x8] sm:$0xff]
  %v21 = vld [vmem:[%s0 + $0x10] sm:$0xff]
  %v22 = vld [vmem:[%s0 + $0x18] sm:$0xff]
  %v23 = vld [vmem:[%s1] sm:$0xff]
  %v24 = vld [vmem:[%s1 + $0x8] sm:$0xff]
  %vm25 = vcmask 130048
  %v27 = vsel %vm25, %v19, 0
  %v30 = vsel %vm25, %v20, 0
  %v33 = vsel %vm25, %v21, 0
  %v36 = vsel %vm25, %v22, 0
  %38 = vmatprep.subr.mxu0 0.0
  %39 = vmatpush1.msra.mxu0 %v23
  %40 = vmatprep.subr.mxu0 0.0
  %41 = vmatpush1.msra.mxu0 %v24
  %42 = vmatprep.subr.mxu0 0.0
  %43 = vmatpush1.msra.mxu0 0.0
  %44 = vmatprep.subr.mxu0 0.0
  %45 = vmatpush1.msra.mxu0 0.0
  %46 = vmatprep.subr.mxu0 0.0
  %47 = vmatpush1.msra.mxu0 0.0
  %48 = vmatprep.subr.mxu0 0.0
  %49 = vmatpush1.msra.mxu0 0.0
  %50 = vmatprep.subr.mxu0 0.0
  %51 = vmatpush1.msra.mxu0 0.0
  %52 = vmatprep.subr.mxu0 0.0
  %53 = vmatpush1.msra.mxu0 0.0
  %54 = vmatprep.subr.mxu0 0.0
  %55 = vmatpush1.msra.mxu0 0.0
  %56 = vmatprep.subr.mxu0 0.0
  %57 = vmatpush1.msra.mxu0 0.0
  %58 = vmatprep.subr.mxu0 0.0
  %59 = vmatpush1.msra.mxu0 0.0
  %60 = vmatprep.subr.mxu0 0.0
  %61 = vmatpush1.msra.mxu0 0.0
  %62 = vmatprep.subr.mxu0 0.0
  %63 = vmatpush1.msra.mxu0 0.0
  %64 = vmatprep.subr.mxu0 0.0
  %65 = vmatpush1.msra.mxu0 0.0
  %66 = vmatprep.subr.mxu0 0.0
  %67 = vmatpush1.msra.mxu0 0.0
  %68 = vmatprep.subr.mxu0 0.0
  %69 = vmatpush1.msra.mxu0 0.0
  %70 = vmatprep.subr.mxu0 0.0
  %71 = vmatpush1.msra.mxu0 0.0
  %72 = vmatprep.subr.mxu0 0.0
  %73 = vmatpush1.msra.mxu0 0.0
  %74 = vmatprep.subr.mxu0 0.0
  %75 = vmatpush1.msra.mxu0 0.0
  %76 = vmatprep.subr.mxu0 0.0
  %77 = vmatpush1.msra.mxu0 0.0
  %78 = vmatprep.subr.mxu0 0.0
  %79 = vmatpush1.msra.mxu0 0.0
  %80 = vmatprep.subr.mxu0 0.0
  %81 = vmatpush1.msra.mxu0 0.0
  %82 = vmatprep.subr.mxu0 0.0
  %83 = vmatpush1.msra.mxu0 0.0
  %84 = vmatprep.subr.mxu0 0.0
  %85 = vmatpush1.msra.mxu0 0.0
  %86 = vmatprep.subr.mxu0 0.0
  %87 = vmatpush1.msra.mxu0 0.0
  %88 = vmatprep.subr.mxu0 0.0
  %89 = vmatpush1.msra.mxu0 0.0
  %90 = vmatprep.subr.mxu0 0.0
  %91 = vmatpush1.msra.mxu0 0.0
  %92 = vmatprep.subr.mxu0 0.0
  %93 = vmatpush1.msra.mxu0 0.0
  %94 = vmatprep.subr.mxu0 0.0
  %95 = vmatpush1.msra.mxu0 0.0
  %96 = vmatprep.subr.mxu0 0.0
  %97 = vmatpush1.msra.mxu0 0.0
  %98 = vmatprep.subr.mxu0 0.0
  %99 = vmatpush1.msra.mxu0 0.0
  %100 = vmatprep.subr.mxu0 0.0
  %101 = vmatpush1.msra.mxu0 0.0
  %102 = vmatprep.mubr.f32.mxu0 0.0
  %103 = vmatmul.mubr.f32.gmra.mrb[0].mxu0 %v27
  %v104 = vpop.f32.mrb[0].mxu0
  %v105 = vadd.f32 0.0, %v104
  %v106 = vpop.f32.mrb[0].mxu0
  %107 = vmatprep.mubr.f32.mxu0 0.0
  %108 = vmatmul.mubr.f32.gmra.mrb[0].mxu0 %v30
  %v109 = vpop.f32.mrb[0].mxu0
  %v110 = vadd.f32 0.0, %v109
  %v111 = vpop.f32.mrb[0].mxu0
  %112 = vmatprep.mubr.f32.mxu0 0.0
  %113 = vmatmul.mubr.f32.gmra.mrb[0].mxu0 %v33
  %v114 = vpop.f32.mrb[0].mxu0
  %v115 = vadd.f32 0.0, %v114
  %v116 = vpop.f32.mrb[0].mxu0
  %117 = vmatprep.mubr.f32.mxu0 0.0
  %118 = vmatmul.mubr.f32.gmra.mrb[0].mxu0 %v36
  %v119 = vpop.f32.mrb[0].mxu0
  %v120 = vadd.f32 0.0, %v119
  %v121 = vpop.f32.mrb[0].mxu0
  %122 = vdwg.mxu0
  %123 = vst.msk [vmem:[#allocation2] sm:$0xff] %vm25, %v105
  %124 = vst.msk [vmem:[#allocation2 + $0x8] sm:$0xff] %vm25, %v110
  %127 = vrot.lane.b32.xlu0 %v115, 16
  %v128 = vpop.permute.xlu0 %127
  %129 = vrot.lane.b32.xlu0 %v120, 16
  %v130 = vpop.permute.xlu0 %129
  %vm133 = vcmask 261248
  %134 = vst.msk [vmem:[#allocation2] sm:$0xff] %vm133, %v128
  %135 = vst.msk [vmem:[#allocation2 + $0x8] sm:$0xff] %vm133, %v130
  %138 = vrot.lane.b32.xlu0 %v105, 112
  %v139 = vpop.permute.xlu0 %138
  %140 = vrot.lane.b32.xlu0 %v110, 112
  %v141 = vpop.permute.xlu0 %140
  %144 = vst.msk [vmem:[#allocation2 + $0x10] sm:$0xff] %vm25, %v139
  %145 = vst.msk [vmem:[#allocation2 + $0x18] sm:$0xff] %vm25, %v141
  %146 = vst.msk [vmem:[#allocation2 + $0x10] sm:$0xff] %vm133, %v115
  %147 = vst.msk [vmem:[#allocation2 + $0x18] sm:$0xff] %vm133, %v120
  %148 = vrot.lane.b32.xlu0 %v105, 96
  %v149 = vpop.permute.xlu0 %148
  %150 = vrot.lane.b32.xlu0 %v110, 96
  %v151 = vpop.permute.xlu0 %150
  %154 = vst.msk [vmem:[#allocation2 + $0x20] sm:$0xff] %vm25, %v149
  %155 = vst.msk [vmem:[#allocation2 + $0x28] sm:$0xff] %vm25, %v151
  %156 = vrot.lane.b32.xlu0 %v115, 112
  %v157 = vpop.permute.xlu0 %156
  %158 = vrot.lane.b32.xlu0 %v120, 112
  %v159 = vpop.permute.xlu0 %158
  %162 = vst.msk [vmem:[#allocation2 + $0x20] sm:$0xff] %vm133, %v157
  %163 = vst.msk [vmem:[#allocation2 + $0x28] sm:$0xff] %vm133, %v159
  %164 = vrot.lane.b32.xlu0 %v105, 80
  %v165 = vpop.permute.xlu0 %164
  %166 = vrot.lane.b32.xlu0 %v110, 80
  %v167 = vpop.permute.xlu0 %166
  %170 = vst.msk [vmem:[#allocation2 + $0x30] sm:$0xff] %vm25, %v165
  %171 = vst.msk [vmem:[#allocation2 + $0x38] sm:$0xff] %vm25, %v167
  %172 = vrot.lane.b32.xlu0 %v115, 96
  %v173 = vpop.permute.xlu0 %172
  %174 = vrot.lane.b32.xlu0 %v120, 96
  %v175 = vpop.permute.xlu0 %174
  %178 = vst.msk [vmem:[#allocation2 + $0x30] sm:$0xff] %vm133, %v173
  %179 = vst.msk [vmem:[#allocation2 + $0x38] sm:$0xff] %vm133, %v175
  %180 = vrot.lane.b32.xlu0 %v105, 64
  %v181 = vpop.permute.xlu0 %180
  %182 = vrot.lane.b32.xlu0 %v110, 64
  %v183 = vpop.permute.xlu0 %182
  %186 = vst.msk [vmem:[#allocation2 + $0x40] sm:$0xff] %vm25, %v181
  %187 = vst.msk [vmem:[#allocation2 + $0x48] sm:$0xff] %vm25, %v183
  %188 = vrot.lane.b32.xlu0 %v115, 80
  %v189 = vpop.permute.xlu0 %188
  %190 = vrot.lane.b32.xlu0 %v120, 80
  %v191 = vpop.permute.xlu0 %190
  %194 = vst.msk [vmem:[#allocation2 + $0x40] sm:$0xff] %vm133, %v189
  %195 = vst.msk [vmem:[#allocation2 + $0x48] sm:$0xff] %vm133, %v191
  %196 = vrot.lane.b32.xlu0 %v105, 48
  %v197 = vpop.permute.xlu0 %196
  %198 = vrot.lane.b32.xlu0 %v110, 48
  %v199 = vpop.permute.xlu0 %198
  %202 = vst.msk [vmem:[#allocation2 + $0x50] sm:$0xff] %vm25, %v197
  %203 = vst.msk [vmem:[#allocation2 + $0x58] sm:$0xff] %vm25, %v199
  %204 = vrot.lane.b32.xlu0 %v115, 64
  %v205 = vpop.permute.xlu0 %204
  %206 = vrot.lane.b32.xlu0 %v120, 64
  %v207 = vpop.permute.xlu0 %206
  %210 = vst.msk [vmem:[#allocation2 + $0x50] sm:$0xff] %vm133, %v205
  %211 = vst.msk [vmem:[#allocation2 + $0x58] sm:$0xff] %vm133, %v207
  %vm212 = vcmask 253952
  %213 = vst.msk [vmem:[#allocation2 + $0x60] sm:$0x1] %vm212, 1.0
  %v214 = vld [vmem:[%s2] sm:$0xff]
  %v215 = vld [vmem:[%s2 + $0x8] sm:$0xff]
  %v216 = vld [vmem:[%s2 + $0x10] sm:$0xff]
  %v217 = vld [vmem:[%s2 + $0x18] sm:$0xff]
  %v218 = vld [vmem:[#allocation2] sm:$0xff]
  %v219 = vld [vmem:[#allocation2 + $0x8] sm:$0xff]
  %v220 = vld [vmem:[#allocation2 + $0x10] sm:$0xff]
  %v221 = vld [vmem:[#allocation2 + $0x18] sm:$0xff]
  %v222 = vld [vmem:[#allocation2 + $0x20] sm:$0xff]
  %v223 = vld [vmem:[#allocation2 + $0x28] sm:$0xff]
  %v224 = vld [vmem:[#allocation2 + $0x30] sm:$0xff]
  %v225 = vld [vmem:[#allocation2 + $0x38] sm:$0xff]
  %v226 = vld [vmem:[#allocation2 + $0x40] sm:$0xff]
  %v227 = vld [vmem:[#allocation2 + $0x48] sm:$0xff]
  %v228 = vld [vmem:[#allocation2 + $0x50] sm:$0xff]
  %v229 = vld [vmem:[#allocation2 + $0x58] sm:$0xff]
  %v230 = vld [vmem:[#allocation2 + $0x60] sm:$0x1]
  %vm231 = vcmask 793600
  %v233 = vsel %vm231, %v214, 0
  %v236 = vsel %vm231, %v215, 0
  %v239 = vsel %vm231, %v216, 0
  %v242 = vsel %vm231, %v217, 0
  %vm244 = vcmask 1040384
  %v246 = vsel %vm244, %v230, 0
  %248 = vmatprep.subr.mxu0 0.0
  %249 = vmatpush1.msra.mxu0 %v218
  %250 = vmatprep.subr.mxu0 0.0
  %251 = vmatpush1.msra.mxu0 %v219
  %252 = vmatprep.subr.mxu0 0.0
  %253 = vmatpush1.msra.mxu0 %v220
  %254 = vmatprep.subr.mxu0 0.0
  %255 = vmatpush1.msra.mxu0 %v221
  %256 = vmatprep.subr.mxu0 0.0
  %257 = vmatpush1.msra.mxu0 %v222
  %258 = vmatprep.subr.mxu0 0.0
  %259 = vmatpush1.msra.mxu0 %v223
  %260 = vmatprep.subr.mxu0 0.0
  %261 = vmatpush1.msra.mxu0 %v224
  %262 = vmatprep.subr.mxu0 0.0
  %263 = vmatpush1.msra.mxu0 %v225
  %264 = vmatprep.subr.mxu0 0.0
  %265 = vmatpush1.msra.mxu0 %v226
  %266 = vmatprep.subr.mxu0 0.0
  %267 = vmatpush1.msra.mxu0 %v227
  %268 = vmatprep.subr.mxu0 0.0
  %269 = vmatpush1.msra.mxu0 %v228
  %270 = vmatprep.subr.mxu0 0.0
  %271 = vmatpush1.msra.mxu0 %v229
  %272 = vmatprep.subr.mxu0 0.0
  %273 = vmatpush1.msra.mxu0 %v246
  %274 = vmatprep.subr.mxu0 0.0
  %275 = vmatpush1.msra.mxu0 0.0
  %276 = vmatprep.subr.mxu0 0.0
  %277 = vmatpush1.msra.mxu0 0.0
  %278 = vmatprep.subr.mxu0 0.0
  %279 = vmatpush1.msra.mxu0 0.0
  %280 = vmatprep.subr.mxu0 0.0
  %281 = vmatpush1.msra.mxu0 0.0
  %282 = vmatprep.subr.mxu0 0.0
  %283 = vmatpush1.msra.mxu0 0.0
  %284 = vmatprep.subr.mxu0 0.0
  %285 = vmatpush1.msra.mxu0 0.0
  %286 = vmatprep.subr.mxu0 0.0
  %287 = vmatpush1.msra.mxu0 0.0
  %288 = vmatprep.subr.mxu0 0.0
  %289 = vmatpush1.msra.mxu0 0.0
  %290 = vmatprep.subr.mxu0 0.0
  %291 = vmatpush1.msra.mxu0 0.0
  %292 = vmatprep.subr.mxu0 0.0
  %293 = vmatpush1.msra.mxu0 0.0
  %294 = vmatprep.subr.mxu0 0.0
  %295 = vmatpush1.msra.mxu0 0.0
  %296 = vmatprep.subr.mxu0 0.0
  %297 = vmatpush1.msra.mxu0 0.0
  %298 = vmatprep.subr.mxu0 0.0
  %299 = vmatpush1.msra.mxu0 0.0
  %300 = vmatprep.subr.mxu0 0.0
  %301 = vmatpush1.msra.mxu0 0.0
  %302 = vmatprep.subr.mxu0 0.0
  %303 = vmatpush1.msra.mxu0 0.0
  %304 = vmatprep.subr.mxu0 0.0
  %305 = vmatpush1.msra.mxu0 0.0
  %306 = vmatprep.subr.mxu0 0.0
  %307 = vmatpush1.msra.mxu0 0.0
  %308 = vmatprep.subr.mxu0 0.0
  %309 = vmatpush1.msra.mxu0 0.0
  %310 = vmatprep.subr.mxu0 0.0
  %311 = vmatpush1.msra.mxu0 0.0
  %312 = vmatprep.mubr.f32.mxu0 0.0
  %313 = vmatmul.mubr.f32.gmra.mrb[0].mxu0 %v233
  %v314 = vpop.f32.mrb[0].mxu0
  %v315 = vadd.f32 0.0, %v314
  %v316 = vpop.f32.mrb[0].mxu0
  %317 = vmatprep.mubr.f32.mxu0 0.0
  %318 = vmatmul.mubr.f32.gmra.mrb[0].mxu0 %v236
  %v319 = vpop.f32.mrb[0].mxu0
  %v320 = vadd.f32 0.0, %v319
  %v321 = vpop.f32.mrb[0].mxu0
  %322 = vmatprep.mubr.f32.mxu0 0.0
  %323 = vmatmul.mubr.f32.gmra.mrb[0].mxu0 %v239
  %v324 = vpop.f32.mrb[0].mxu0
  %v325 = vadd.f32 0.0, %v324
  %v326 = vpop.f32.mrb[0].mxu0
  %327 = vmatprep.mubr.f32.mxu0 0.0
  %328 = vmatmul.mubr.f32.gmra.mrb[0].mxu0 %v242
  %v329 = vpop.f32.mrb[0].mxu0
  %v330 = vadd.f32 0.0, %v329
  %v331 = vpop.f32.mrb[0].mxu0
  %332 = vdwg.mxu0
  %v333 = vmul.f32 %v315, 0.5
  %v334 = vtanh.pop %v333
  %v335 = vadd.f32 %v334, 1.0
  %v336 = vmul.f32 %v335, 0.5
  %v337 = vmul.f32 %v320, 0.5
  %v338 = vtanh.pop %v337
  %v339 = vadd.f32 %v338, 1.0
  %v340 = vmul.f32 %v339, 0.5
  %v341 = vmul.f32 %v325, 0.5
  %v342 = vtanh.pop %v341
  %v343 = vadd.f32 %v342, 1.0
  %v344 = vmul.f32 %v343, 0.5
  %v345 = vtanh.pop %v330
  %v346 = vld [vmem:[%s3] sm:$0xff]
  %v347 = vmul.f32 %v340, %v346
  %v348 = vmul.f32 %v336, %v345
  %v349 = vadd.f32 %v347, %v348
  %v350 = vtanh.pop %v349
  %v351 = vmul.f32 %v344, %v350
  %vm352 = vcmask 261120
  %353 = vst.msk [vmem:[%s4] sm:$0xff] %vm352, %v351
  %354 = vst.msk [vmem:[%s5] sm:$0xff] %vm352, %v349
  // Predicated region
  $region18: #{agcrn_cell_forward.1} parent=0 // pred_check
    _
  $region19: #{agcrn_cell_forward.1} parent=0 // pred_check_branch
    %356 = sbr.rel (0) target = $region21
  $region20: #{agcrn_cell_forward.1} parent=0 // pred_region
    _
  $region21: #{agcrn_cell_forward.1} parent=0 // pred_fallthru
    _
  // Predicated region
  $region22: #{agcrn_cell_forward.1} parent=0 // pred_check
    _
  $region23: #{agcrn_cell_forward.1} parent=0 // pred_check_branch
    %358 = sbr.rel (0) target = $region25
  $region24: #{agcrn_cell_forward.1} parent=0 // pred_region
    _
  $region25: #{agcrn_cell_forward.1} parent=0 // pred_fallthru
    _
  // Predicated region
  $region26: #{agcrn_cell_forward.1} parent=0 // pred_check
    _
  $region27: #{agcrn_cell_forward.1} parent=0 // pred_check_branch
    %360 = sbr.rel (0) target = $region29
  $region28: #{agcrn_cell_forward.1} parent=0 // pred_region
    _
  $region29: #{agcrn_cell_forward.1} parent=0 // pred_fallthru
    _
  // Predicated region
  $region30: #{agcrn_cell_forward.1} parent=0 // pred_check
    _
  $region31: #{agcrn_cell_forward.1} parent=0 // pred_check_branch
    %362 = sbr.rel (0) target = $region33
  $region32: #{agcrn_cell_forward.1} parent=0 // pred_region
    _
  $region33: #{agcrn_cell_forward.1} parent=0 // pred_fallthru
    _

</llo_original>
